<compile_context>
chip_gen: v7x
topology: tpu7x:2x2x1
jax: 0.10.0
libtpu: 0.0.40
codegen_flags: <defaults>
</compile_context>

<pallas_src>
import jax
import jax.numpy as jnp
from jax.experimental import pallas as pl
from jax.experimental.pallas import tpu as pltpu


# ---- Synthetic StateRepresentation (19 channels, per-channel vocab sizes) ----
CHANNEL_SIZES = (3, 4, 5, 3, 4, 3, 5, 4, 4, 4, 3, 3, 3, 2, 4, 4, 2, 2, 2)  # 19 channels
NUM_CHANNELS = len(CHANNEL_SIZES)          # 19  (== get_state_num_channel())
STATE_LENGTH = sum(CHANNEL_SIZES)          # 64  (== get_state_length(), embedding dim L)


def _compute_prefixes(sizes):
    p, acc = [], 0
    for s in sizes:
        p.append(acc)
        acc += s
    return tuple(p)


PREFIXES = _compute_prefixes(CHANNEL_SIZES)       # static Python ints

# Static row -> channel map (which channel owns each output row).
CHANNEL_OF_ROW = []
for _c, _s in enumerate(CHANNEL_SIZES):
    CHANNEL_OF_ROW.extend([_c] * _s)

_SUB = 8  # sublane group size
assert STATE_LENGTH % _SUB == 0, "state length must be a multiple of 8 sublanes"


def _embedder_kernel(state_ref, out_ref):
    # state_ref: (1, C, TS) int32   out_ref: (1, L, TS) float32
    st = state_ref[0]                                   # (C, TS) — single tile load
    groups = []
    for g in range(STATE_LENGTH // _SUB):
        r0 = g * _SUB
        rows = range(r0, r0 + _SUB)
        chans = sorted(set(CHANNEL_OF_ROW[r] for r in rows))   # <=4 channels per group

        # Global row indices of this sublane group (static offset + 2-D iota).
        row_ids = jax.lax.broadcasted_iota(jnp.int32, (_SUB, 1), 0) + r0

        # Channel-replicated state slab + matching prefix column via <=3 selects.
        slab = st[chans[0]][None, :]                    # (1, TS)
        pfx = PREFIXES[chans[0]]                        # python int
        for c in chans[1:]:
            hit = row_ids >= PREFIXES[c]                # (8, 1) bool
            slab = jnp.where(hit, st[c][None, :], slab) # -> (8, TS)
            pfx = jnp.where(hit, PREFIXES[c], pfx)      # -> (8, 1)

        # Target local index per row; -1 for the zeroed prefix rows (local==0)
        # never matches a non-negative state value.
        local = row_ids - pfx                           # (8, 1)
        tgt = jnp.where(local == 0, -1, local)          # (8, 1)

        groups.append((slab == tgt).astype(jnp.float32))   # (8, TS)

    # One large lane-dense, sublane-aligned store per tile.
    out_ref[0] = jnp.concatenate(groups, axis=0)        # (L, TS)


def _pick_tile(S, max_tile_s):
    if S <= max_tile_s:
        return S
    cands = [t for t in range(128, max_tile_s + 1, 128) if S % t == 0]
    return max(cands) if cands else S


def state_onehot_embed(state, *, max_tile_s=2048):
    """state: (B, C, H, W) float/int (torch NCHW). Returns (B, L, H, W) float32."""
    B, C, H, W = state.shape
    assert C == NUM_CHANNELS
    S = H * W
    tile_s = _pick_tile(S, max_tile_s)
    assert S % tile_s == 0

    st = state.astype(jnp.int32).reshape(B, C, S)
    out = pl.pallas_call(
        _embedder_kernel,
        out_shape=jax.ShapeDtypeStruct((B, STATE_LENGTH, S), jnp.float32),
        grid_spec=pltpu.PrefetchScalarGridSpec(
            num_scalar_prefetch=0,
            grid=(B, S // tile_s),
            in_specs=[pl.BlockSpec((1, C, tile_s), lambda b, s: (b, 0, s))],
            out_specs=pl.BlockSpec((1, STATE_LENGTH, tile_s), lambda b, s: (b, 0, s)),
        ),
        compiler_params=pltpu.CompilerParams(
            dimension_semantics=("parallel", "parallel")),
    )(st)
    return out.reshape(B, STATE_LENGTH, H, W)


def _reference(state):
    """Pure-JAX mirror of the torch module (embedding-table gather + permute + sum)."""
    B, C, H, W = state.shape
    prefix = jnp.array(PREFIXES, dtype=jnp.int32).reshape(1, C, 1, 1)
    weight = jnp.eye(STATE_LENGTH, dtype=jnp.float32)
    pidx = jnp.array(PREFIXES)
    weight = weight.at[pidx, pidx].set(0.0)             # weight[prefix, prefix] = 0
    g = state.astype(jnp.int32) + prefix                # (B, C, H, W)
    emb = weight[g]                                     # (B, C, H, W, L)
    emb = jnp.transpose(emb, (0, 4, 2, 3, 1))           # (B, L, H, W, C)
    return jnp.sum(emb, axis=4)                         # (B, L, H, W)


if __name__ == "__main__":
    B, H, W = 2, 16, 16
    key = jax.random.PRNGKey(0)
    keys = jax.random.split(key, NUM_CHANNELS)
    chans = [
        jax.random.randint(keys[c], (B, 1, H, W), 0, CHANNEL_SIZES[c])
        for c in range(NUM_CHANNELS)
    ]
    state = jnp.concatenate(chans, axis=1).astype(jnp.float32)  # (2, 19, 16, 16)

    out = state_onehot_embed(state)
    out = jax.block_until_ready(out)

    ref = _reference(state)
    assert out.shape == (B, STATE_LENGTH, H, W)
    assert jnp.allclose(out, ref), "Pallas kernel mismatch vs reference"
    print("KERNEL_OK")
</pallas_src>

<mosaic_0001>
module attributes {stable_mosaic.version = 11 : i64} {
  func.func @_embedder_kernel(%arg0: i32, %arg1: i32, %arg2: memref<1x19x256xi32, #tpu.memory_space<vmem>>, %arg3: memref<1x64x256xf32, #tpu.memory_space<vmem>>) attributes {dimension_semantics = [#tpu.dimension_semantics<parallel>, #tpu.dimension_semantics<parallel>], iteration_bounds = array<i64: 2, 1>, scalar_prefetch = 0 : i64, scratch_operands = 0 : i64, tpu.core_type = #tpu.core_type<tc>, window_params = [{transform_indices = @transform_0, window_bounds = array<i64: 1, 19, 256>}, {transform_indices = @transform_1, window_bounds = array<i64: 1, 64, 256>}]} {
    %c0 = arith.constant 0 : index
    %c0_0 = arith.constant 0 : index
    %c0_1 = arith.constant 0 : index
    %0 = vector.load %arg2[%c0, %c0_0, %c0_1] : memref<1x19x256xi32, #tpu.memory_space<vmem>>, vector<1x19x256xi32>
    %1 = vector.shape_cast %0 : vector<1x19x256xi32> to vector<19x256xi32>
    %2 = tpu.iota {dimensions = array<i32: 0>} : vector<8x1xi32>
    %c0_i32 = arith.constant 0 : i32
    %3 = vector.broadcast %c0_i32 : i32 to vector<8x1xi32>
    %4 = arith.addi %2, %3 : vector<8x1xi32>
    %5 = vector.extract_strided_slice %1 {offsets = [0, 0], sizes = [1, 256], strides = [1, 1]} : vector<19x256xi32> to vector<1x256xi32>
    %6 = vector.shape_cast %5 : vector<1x256xi32> to vector<256xi32>
    %7 = vector.shape_cast %6 : vector<256xi32> to vector<1x256xi32>
    %c3_i32 = arith.constant 3 : i32
    %8 = vector.broadcast %c3_i32 : i32 to vector<8x1xi32>
    %9 = arith.cmpi sge, %4, %8 : vector<8x1xi32>
    %10 = vector.extract_strided_slice %1 {offsets = [1, 0], sizes = [1, 256], strides = [1, 1]} : vector<19x256xi32> to vector<1x256xi32>
    %11 = vector.shape_cast %10 : vector<1x256xi32> to vector<256xi32>
    %12 = vector.shape_cast %11 : vector<256xi32> to vector<1x256xi32>
    %13 = vector.shape_cast %9 : vector<8x1xi1> to vector<8x1xi1>
    %14 = vector.broadcast %13 : vector<8x1xi1> to vector<8x256xi1>
    %15 = vector.shape_cast %12 : vector<1x256xi32> to vector<1x256xi32>
    %16 = vector.broadcast %15 : vector<1x256xi32> to vector<8x256xi32>
    %17 = vector.shape_cast %7 : vector<1x256xi32> to vector<1x256xi32>
    %18 = vector.broadcast %17 : vector<1x256xi32> to vector<8x256xi32>
    %19 = arith.select %14, %16, %18 : vector<8x256xi1>, vector<8x256xi32>
    %c3_i32_2 = arith.constant 3 : i32
    %c0_i32_3 = arith.constant 0 : i32
    %20 = vector.broadcast %c3_i32_2 : i32 to vector<8x1xi32>
    %21 = vector.broadcast %c0_i32_3 : i32 to vector<8x1xi32>
    %22 = arith.select %9, %20, %21 : vector<8x1xi1>, vector<8x1xi32>
    %c7_i32 = arith.constant 7 : i32
    %23 = vector.broadcast %c7_i32 : i32 to vector<8x1xi32>
    %24 = arith.cmpi sge, %4, %23 : vector<8x1xi32>
    %25 = vector.extract_strided_slice %1 {offsets = [2, 0], sizes = [1, 256], strides = [1, 1]} : vector<19x256xi32> to vector<1x256xi32>
    %26 = vector.shape_cast %25 : vector<1x256xi32> to vector<256xi32>
    %27 = vector.shape_cast %26 : vector<256xi32> to vector<1x256xi32>
    %28 = vector.shape_cast %24 : vector<8x1xi1> to vector<8x1xi1>
    %29 = vector.broadcast %28 : vector<8x1xi1> to vector<8x256xi1>
    %30 = vector.shape_cast %27 : vector<1x256xi32> to vector<1x256xi32>
    %31 = vector.broadcast %30 : vector<1x256xi32> to vector<8x256xi32>
    %32 = arith.select %29, %31, %19 : vector<8x256xi1>, vector<8x256xi32>
    %c7_i32_4 = arith.constant 7 : i32
    %33 = vector.broadcast %c7_i32_4 : i32 to vector<8x1xi32>
    %34 = arith.select %24, %33, %22 : vector<8x1xi1>, vector<8x1xi32>
    %35 = arith.subi %4, %34 : vector<8x1xi32>
    %c0_i32_5 = arith.constant 0 : i32
    %36 = vector.broadcast %c0_i32_5 : i32 to vector<8x1xi32>
    %37 = arith.cmpi eq, %35, %36 : vector<8x1xi32>
    %c-1_i32 = arith.constant -1 : i32
    %38 = vector.broadcast %c-1_i32 : i32 to vector<8x1xi32>
    %39 = arith.select %37, %38, %35 : vector<8x1xi1>, vector<8x1xi32>
    %40 = vector.broadcast %39 : vector<8x1xi32> to vector<8x256xi32>
    %41 = arith.cmpi eq, %32, %40 : vector<8x256xi32>
    %42 = arith.extui %41 : vector<8x256xi1> to vector<8x256xi32>
    %43 = arith.sitofp %42 : vector<8x256xi32> to vector<8x256xf32>
    %44 = tpu.iota {dimensions = array<i32: 0>} : vector<8x1xi32>
    %c8_i32 = arith.constant 8 : i32
    %45 = vector.broadcast %c8_i32 : i32 to vector<8x1xi32>
    %46 = arith.addi %44, %45 : vector<8x1xi32>
    %47 = vector.extract_strided_slice %1 {offsets = [2, 0], sizes = [1, 256], strides = [1, 1]} : vector<19x256xi32> to vector<1x256xi32>
    %48 = vector.shape_cast %47 : vector<1x256xi32> to vector<256xi32>
    %49 = vector.shape_cast %48 : vector<256xi32> to vector<1x256xi32>
    %c12_i32 = arith.constant 12 : i32
    %50 = vector.broadcast %c12_i32 : i32 to vector<8x1xi32>
    %51 = arith.cmpi sge, %46, %50 : vector<8x1xi32>
    %52 = vector.extract_strided_slice %1 {offsets = [3, 0], sizes = [1, 256], strides = [1, 1]} : vector<19x256xi32> to vector<1x256xi32>
    %53 = vector.shape_cast %52 : vector<1x256xi32> to vector<256xi32>
    %54 = vector.shape_cast %53 : vector<256xi32> to vector<1x256xi32>
    %55 = vector.shape_cast %51 : vector<8x1xi1> to vector<8x1xi1>
    %56 = vector.broadcast %55 : vector<8x1xi1> to vector<8x256xi1>
    %57 = vector.shape_cast %54 : vector<1x256xi32> to vector<1x256xi32>
    %58 = vector.broadcast %57 : vector<1x256xi32> to vector<8x256xi32>
    %59 = vector.shape_cast %49 : vector<1x256xi32> to vector<1x256xi32>
    %60 = vector.broadcast %59 : vector<1x256xi32> to vector<8x256xi32>
    %61 = arith.select %56, %58, %60 : vector<8x256xi1>, vector<8x256xi32>
    %c12_i32_6 = arith.constant 12 : i32
    %c7_i32_7 = arith.constant 7 : i32
    %62 = vector.broadcast %c12_i32_6 : i32 to vector<8x1xi32>
    %63 = vector.broadcast %c7_i32_7 : i32 to vector<8x1xi32>
    %64 = arith.select %51, %62, %63 : vector<8x1xi1>, vector<8x1xi32>
    %c15_i32 = arith.constant 15 : i32
    %65 = vector.broadcast %c15_i32 : i32 to vector<8x1xi32>
    %66 = arith.cmpi sge, %46, %65 : vector<8x1xi32>
    %67 = vector.extract_strided_slice %1 {offsets = [4, 0], sizes = [1, 256], strides = [1, 1]} : vector<19x256xi32> to vector<1x256xi32>
    %68 = vector.shape_cast %67 : vector<1x256xi32> to vector<256xi32>
    %69 = vector.shape_cast %68 : vector<256xi32> to vector<1x256xi32>
    %70 = vector.shape_cast %66 : vector<8x1xi1> to vector<8x1xi1>
    %71 = vector.broadcast %70 : vector<8x1xi1> to vector<8x256xi1>
    %72 = vector.shape_cast %69 : vector<1x256xi32> to vector<1x256xi32>
    %73 = vector.broadcast %72 : vector<1x256xi32> to vector<8x256xi32>
    %74 = arith.select %71, %73, %61 : vector<8x256xi1>, vector<8x256xi32>
    %c15_i32_8 = arith.constant 15 : i32
    %75 = vector.broadcast %c15_i32_8 : i32 to vector<8x1xi32>
    %76 = arith.select %66, %75, %64 : vector<8x1xi1>, vector<8x1xi32>
    %77 = arith.subi %46, %76 : vector<8x1xi32>
    %c0_i32_9 = arith.constant 0 : i32
    %78 = vector.broadcast %c0_i32_9 : i32 to vector<8x1xi32>
    %79 = arith.cmpi eq, %77, %78 : vector<8x1xi32>
    %c-1_i32_10 = arith.constant -1 : i32
    %80 = vector.broadcast %c-1_i32_10 : i32 to vector<8x1xi32>
    %81 = arith.select %79, %80, %77 : vector<8x1xi1>, vector<8x1xi32>
    %82 = vector.broadcast %81 : vector<8x1xi32> to vector<8x256xi32>
    %83 = arith.cmpi eq, %74, %82 : vector<8x256xi32>
    %84 = arith.extui %83 : vector<8x256xi1> to vector<8x256xi32>
    %85 = arith.sitofp %84 : vector<8x256xi32> to vector<8x256xf32>
    %86 = tpu.iota {dimensions = array<i32: 0>} : vector<8x1xi32>
    %c16_i32 = arith.constant 16 : i32
    %87 = vector.broadcast %c16_i32 : i32 to vector<8x1xi32>
    %88 = arith.addi %86, %87 : vector<8x1xi32>
    %89 = vector.extract_strided_slice %1 {offsets = [4, 0], sizes = [1, 256], strides = [1, 1]} : vector<19x256xi32> to vector<1x256xi32>
    %90 = vector.shape_cast %89 : vector<1x256xi32> to vector<256xi32>
    %91 = vector.shape_cast %90 : vector<256xi32> to vector<1x256xi32>
    %c19_i32 = arith.constant 19 : i32
    %92 = vector.broadcast %c19_i32 : i32 to vector<8x1xi32>
    %93 = arith.cmpi sge, %88, %92 : vector<8x1xi32>
    %94 = vector.extract_strided_slice %1 {offsets = [5, 0], sizes = [1, 256], strides = [1, 1]} : vector<19x256xi32> to vector<1x256xi32>
    %95 = vector.shape_cast %94 : vector<1x256xi32> to vector<256xi32>
    %96 = vector.shape_cast %95 : vector<256xi32> to vector<1x256xi32>
    %97 = vector.shape_cast %93 : vector<8x1xi1> to vector<8x1xi1>
    %98 = vector.broadcast %97 : vector<8x1xi1> to vector<8x256xi1>
    %99 = vector.shape_cast %96 : vector<1x256xi32> to vector<1x256xi32>
    %100 = vector.broadcast %99 : vector<1x256xi32> to vector<8x256xi32>
    %101 = vector.shape_cast %91 : vector<1x256xi32> to vector<1x256xi32>
    %102 = vector.broadcast %101 : vector<1x256xi32> to vector<8x256xi32>
    %103 = arith.select %98, %100, %102 : vector<8x256xi1>, vector<8x256xi32>
    %c19_i32_11 = arith.constant 19 : i32
    %c15_i32_12 = arith.constant 15 : i32
    %104 = vector.broadcast %c19_i32_11 : i32 to vector<8x1xi32>
    %105 = vector.broadcast %c15_i32_12 : i32 to vector<8x1xi32>
    %106 = arith.select %93, %104, %105 : vector<8x1xi1>, vector<8x1xi32>
    %c22_i32 = arith.constant 22 : i32
    %107 = vector.broadcast %c22_i32 : i32 to vector<8x1xi32>
    %108 = arith.cmpi sge, %88, %107 : vector<8x1xi32>
    %109 = vector.extract_strided_slice %1 {offsets = [6, 0], sizes = [1, 256], strides = [1, 1]} : vector<19x256xi32> to vector<1x256xi32>
    %110 = vector.shape_cast %109 : vector<1x256xi32> to vector<256xi32>
    %111 = vector.shape_cast %110 : vector<256xi32> to vector<1x256xi32>
    %112 = vector.shape_cast %108 : vector<8x1xi1> to vector<8x1xi1>
    %113 = vector.broadcast %112 : vector<8x1xi1> to vector<8x256xi1>
    %114 = vector.shape_cast %111 : vector<1x256xi32> to vector<1x256xi32>
    %115 = vector.broadcast %114 : vector<1x256xi32> to vector<8x256xi32>
    %116 = arith.select %113, %115, %103 : vector<8x256xi1>, vector<8x256xi32>
    %c22_i32_13 = arith.constant 22 : i32
    %117 = vector.broadcast %c22_i32_13 : i32 to vector<8x1xi32>
    %118 = arith.select %108, %117, %106 : vector<8x1xi1>, vector<8x1xi32>
    %119 = arith.subi %88, %118 : vector<8x1xi32>
    %c0_i32_14 = arith.constant 0 : i32
    %120 = vector.broadcast %c0_i32_14 : i32 to vector<8x1xi32>
    %121 = arith.cmpi eq, %119, %120 : vector<8x1xi32>
    %c-1_i32_15 = arith.constant -1 : i32
    %122 = vector.broadcast %c-1_i32_15 : i32 to vector<8x1xi32>
    %123 = arith.select %121, %122, %119 : vector<8x1xi1>, vector<8x1xi32>
    %124 = vector.broadcast %123 : vector<8x1xi32> to vector<8x256xi32>
    %125 = arith.cmpi eq, %116, %124 : vector<8x256xi32>
    %126 = arith.extui %125 : vector<8x256xi1> to vector<8x256xi32>
    %127 = arith.sitofp %126 : vector<8x256xi32> to vector<8x256xf32>
    %128 = tpu.iota {dimensions = array<i32: 0>} : vector<8x1xi32>
    %c24_i32 = arith.constant 24 : i32
    %129 = vector.broadcast %c24_i32 : i32 to vector<8x1xi32>
    %130 = arith.addi %128, %129 : vector<8x1xi32>
    %131 = vector.extract_strided_slice %1 {offsets = [6, 0], sizes = [1, 256], strides = [1, 1]} : vector<19x256xi32> to vector<1x256xi32>
    %132 = vector.shape_cast %131 : vector<1x256xi32> to vector<256xi32>
    %133 = vector.shape_cast %132 : vector<256xi32> to vector<1x256xi32>
    %c27_i32 = arith.constant 27 : i32
    %134 = vector.broadcast %c27_i32 : i32 to vector<8x1xi32>
    %135 = arith.cmpi sge, %130, %134 : vector<8x1xi32>
    %136 = vector.extract_strided_slice %1 {offsets = [7, 0], sizes = [1, 256], strides = [1, 1]} : vector<19x256xi32> to vector<1x256xi32>
    %137 = vector.shape_cast %136 : vector<1x256xi32> to vector<256xi32>
    %138 = vector.shape_cast %137 : vector<256xi32> to vector<1x256xi32>
    %139 = vector.shape_cast %135 : vector<8x1xi1> to vector<8x1xi1>
    %140 = vector.broadcast %139 : vector<8x1xi1> to vector<8x256xi1>
    %141 = vector.shape_cast %138 : vector<1x256xi32> to vector<1x256xi32>
    %142 = vector.broadcast %141 : vector<1x256xi32> to vector<8x256xi32>
    %143 = vector.shape_cast %133 : vector<1x256xi32> to vector<1x256xi32>
    %144 = vector.broadcast %143 : vector<1x256xi32> to vector<8x256xi32>
    %145 = arith.select %140, %142, %144 : vector<8x256xi1>, vector<8x256xi32>
    %c27_i32_16 = arith.constant 27 : i32
    %c22_i32_17 = arith.constant 22 : i32
    %146 = vector.broadcast %c27_i32_16 : i32 to vector<8x1xi32>
    %147 = vector.broadcast %c22_i32_17 : i32 to vector<8x1xi32>
    %148 = arith.select %135, %146, %147 : vector<8x1xi1>, vector<8x1xi32>
    %c31_i32 = arith.constant 31 : i32
    %149 = vector.broadcast %c31_i32 : i32 to vector<8x1xi32>
    %150 = arith.cmpi sge, %130, %149 : vector<8x1xi32>
    %151 = vector.extract_strided_slice %1 {offsets = [8, 0], sizes = [1, 256], strides = [1, 1]} : vector<19x256xi32> to vector<1x256xi32>
    %152 = vector.shape_cast %151 : vector<1x256xi32> to vector<256xi32>
    %153 = vector.shape_cast %152 : vector<256xi32> to vector<1x256xi32>
    %154 = vector.shape_cast %150 : vector<8x1xi1> to vector<8x1xi1>
    %155 = vector.broadcast %154 : vector<8x1xi1> to vector<8x256xi1>
    %156 = vector.shape_cast %153 : vector<1x256xi32> to vector<1x256xi32>
    %157 = vector.broadcast %156 : vector<1x256xi32> to vector<8x256xi32>
    %158 = arith.select %155, %157, %145 : vector<8x256xi1>, vector<8x256xi32>
    %c31_i32_18 = arith.constant 31 : i32
    %159 = vector.broadcast %c31_i32_18 : i32 to vector<8x1xi32>
    %160 = arith.select %150, %159, %148 : vector<8x1xi1>, vector<8x1xi32>
    %161 = arith.subi %130, %160 : vector<8x1xi32>
    %c0_i32_19 = arith.constant 0 : i32
    %162 = vector.broadcast %c0_i32_19 : i32 to vector<8x1xi32>
    %163 = arith.cmpi eq, %161, %162 : vector<8x1xi32>
    %c-1_i32_20 = arith.constant -1 : i32
    %164 = vector.broadcast %c-1_i32_20 : i32 to vector<8x1xi32>
    %165 = arith.select %163, %164, %161 : vector<8x1xi1>, vector<8x1xi32>
    %166 = vector.broadcast %165 : vector<8x1xi32> to vector<8x256xi32>
    %167 = arith.cmpi eq, %158, %166 : vector<8x256xi32>
    %168 = arith.extui %167 : vector<8x256xi1> to vector<8x256xi32>
    %169 = arith.sitofp %168 : vector<8x256xi32> to vector<8x256xf32>
    %170 = tpu.iota {dimensions = array<i32: 0>} : vector<8x1xi32>
    %c32_i32 = arith.constant 32 : i32
    %171 = vector.broadcast %c32_i32 : i32 to vector<8x1xi32>
    %172 = arith.addi %170, %171 : vector<8x1xi32>
    %173 = vector.extract_strided_slice %1 {offsets = [8, 0], sizes = [1, 256], strides = [1, 1]} : vector<19x256xi32> to vector<1x256xi32>
    %174 = vector.shape_cast %173 : vector<1x256xi32> to vector<256xi32>
    %175 = vector.shape_cast %174 : vector<256xi32> to vector<1x256xi32>
    %c35_i32 = arith.constant 35 : i32
    %176 = vector.broadcast %c35_i32 : i32 to vector<8x1xi32>
    %177 = arith.cmpi sge, %172, %176 : vector<8x1xi32>
    %178 = vector.extract_strided_slice %1 {offsets = [9, 0], sizes = [1, 256], strides = [1, 1]} : vector<19x256xi32> to vector<1x256xi32>
    %179 = vector.shape_cast %178 : vector<1x256xi32> to vector<256xi32>
    %180 = vector.shape_cast %179 : vector<256xi32> to vector<1x256xi32>
    %181 = vector.shape_cast %177 : vector<8x1xi1> to vector<8x1xi1>
    %182 = vector.broadcast %181 : vector<8x1xi1> to vector<8x256xi1>
    %183 = vector.shape_cast %180 : vector<1x256xi32> to vector<1x256xi32>
    %184 = vector.broadcast %183 : vector<1x256xi32> to vector<8x256xi32>
    %185 = vector.shape_cast %175 : vector<1x256xi32> to vector<1x256xi32>
    %186 = vector.broadcast %185 : vector<1x256xi32> to vector<8x256xi32>
    %187 = arith.select %182, %184, %186 : vector<8x256xi1>, vector<8x256xi32>
    %c35_i32_21 = arith.constant 35 : i32
    %c31_i32_22 = arith.constant 31 : i32
    %188 = vector.broadcast %c35_i32_21 : i32 to vector<8x1xi32>
    %189 = vector.broadcast %c31_i32_22 : i32 to vector<8x1xi32>
    %190 = arith.select %177, %188, %189 : vector<8x1xi1>, vector<8x1xi32>
    %c39_i32 = arith.constant 39 : i32
    %191 = vector.broadcast %c39_i32 : i32 to vector<8x1xi32>
    %192 = arith.cmpi sge, %172, %191 : vector<8x1xi32>
    %193 = vector.extract_strided_slice %1 {offsets = [10, 0], sizes = [1, 256], strides = [1, 1]} : vector<19x256xi32> to vector<1x256xi32>
    %194 = vector.shape_cast %193 : vector<1x256xi32> to vector<256xi32>
    %195 = vector.shape_cast %194 : vector<256xi32> to vector<1x256xi32>
    %196 = vector.shape_cast %192 : vector<8x1xi1> to vector<8x1xi1>
    %197 = vector.broadcast %196 : vector<8x1xi1> to vector<8x256xi1>
    %198 = vector.shape_cast %195 : vector<1x256xi32> to vector<1x256xi32>
    %199 = vector.broadcast %198 : vector<1x256xi32> to vector<8x256xi32>
    %200 = arith.select %197, %199, %187 : vector<8x256xi1>, vector<8x256xi32>
    %c39_i32_23 = arith.constant 39 : i32
    %201 = vector.broadcast %c39_i32_23 : i32 to vector<8x1xi32>
    %202 = arith.select %192, %201, %190 : vector<8x1xi1>, vector<8x1xi32>
    %203 = arith.subi %172, %202 : vector<8x1xi32>
    %c0_i32_24 = arith.constant 0 : i32
    %204 = vector.broadcast %c0_i32_24 : i32 to vector<8x1xi32>
    %205 = arith.cmpi eq, %203, %204 : vector<8x1xi32>
    %c-1_i32_25 = arith.constant -1 : i32
    %206 = vector.broadcast %c-1_i32_25 : i32 to vector<8x1xi32>
    %207 = arith.select %205, %206, %203 : vector<8x1xi1>, vector<8x1xi32>
    %208 = vector.broadcast %207 : vector<8x1xi32> to vector<8x256xi32>
    %209 = arith.cmpi eq, %200, %208 : vector<8x256xi32>
    %210 = arith.extui %209 : vector<8x256xi1> to vector<8x256xi32>
    %211 = arith.sitofp %210 : vector<8x256xi32> to vector<8x256xf32>
    %212 = tpu.iota {dimensions = array<i32: 0>} : vector<8x1xi32>
    %c40_i32 = arith.constant 40 : i32
    %213 = vector.broadcast %c40_i32 : i32 to vector<8x1xi32>
    %214 = arith.addi %212, %213 : vector<8x1xi32>
    %215 = vector.extract_strided_slice %1 {offsets = [10, 0], sizes = [1, 256], strides = [1, 1]} : vector<19x256xi32> to vector<1x256xi32>
    %216 = vector.shape_cast %215 : vector<1x256xi32> to vector<256xi32>
    %217 = vector.shape_cast %216 : vector<256xi32> to vector<1x256xi32>
    %c42_i32 = arith.constant 42 : i32
    %218 = vector.broadcast %c42_i32 : i32 to vector<8x1xi32>
    %219 = arith.cmpi sge, %214, %218 : vector<8x1xi32>
    %220 = vector.extract_strided_slice %1 {offsets = [11, 0], sizes = [1, 256], strides = [1, 1]} : vector<19x256xi32> to vector<1x256xi32>
    %221 = vector.shape_cast %220 : vector<1x256xi32> to vector<256xi32>
    %222 = vector.shape_cast %221 : vector<256xi32> to vector<1x256xi32>
    %223 = vector.shape_cast %219 : vector<8x1xi1> to vector<8x1xi1>
    %224 = vector.broadcast %223 : vector<8x1xi1> to vector<8x256xi1>
    %225 = vector.shape_cast %222 : vector<1x256xi32> to vector<1x256xi32>
    %226 = vector.broadcast %225 : vector<1x256xi32> to vector<8x256xi32>
    %227 = vector.shape_cast %217 : vector<1x256xi32> to vector<1x256xi32>
    %228 = vector.broadcast %227 : vector<1x256xi32> to vector<8x256xi32>
    %229 = arith.select %224, %226, %228 : vector<8x256xi1>, vector<8x256xi32>
    %c42_i32_26 = arith.constant 42 : i32
    %c39_i32_27 = arith.constant 39 : i32
    %230 = vector.broadcast %c42_i32_26 : i32 to vector<8x1xi32>
    %231 = vector.broadcast %c39_i32_27 : i32 to vector<8x1xi32>
    %232 = arith.select %219, %230, %231 : vector<8x1xi1>, vector<8x1xi32>
    %c45_i32 = arith.constant 45 : i32
    %233 = vector.broadcast %c45_i32 : i32 to vector<8x1xi32>
    %234 = arith.cmpi sge, %214, %233 : vector<8x1xi32>
    %235 = vector.extract_strided_slice %1 {offsets = [12, 0], sizes = [1, 256], strides = [1, 1]} : vector<19x256xi32> to vector<1x256xi32>
    %236 = vector.shape_cast %235 : vector<1x256xi32> to vector<256xi32>
    %237 = vector.shape_cast %236 : vector<256xi32> to vector<1x256xi32>
    %238 = vector.shape_cast %234 : vector<8x1xi1> to vector<8x1xi1>
    %239 = vector.broadcast %238 : vector<8x1xi1> to vector<8x256xi1>
    %240 = vector.shape_cast %237 : vector<1x256xi32> to vector<1x256xi32>
    %241 = vector.broadcast %240 : vector<1x256xi32> to vector<8x256xi32>
    %242 = arith.select %239, %241, %229 : vector<8x256xi1>, vector<8x256xi32>
    %c45_i32_28 = arith.constant 45 : i32
    %243 = vector.broadcast %c45_i32_28 : i32 to vector<8x1xi32>
    %244 = arith.select %234, %243, %232 : vector<8x1xi1>, vector<8x1xi32>
    %245 = arith.subi %214, %244 : vector<8x1xi32>
    %c0_i32_29 = arith.constant 0 : i32
    %246 = vector.broadcast %c0_i32_29 : i32 to vector<8x1xi32>
    %247 = arith.cmpi eq, %245, %246 : vector<8x1xi32>
    %c-1_i32_30 = arith.constant -1 : i32
    %248 = vector.broadcast %c-1_i32_30 : i32 to vector<8x1xi32>
    %249 = arith.select %247, %248, %245 : vector<8x1xi1>, vector<8x1xi32>
    %250 = vector.broadcast %249 : vector<8x1xi32> to vector<8x256xi32>
    %251 = arith.cmpi eq, %242, %250 : vector<8x256xi32>
    %252 = arith.extui %251 : vector<8x256xi1> to vector<8x256xi32>
    %253 = arith.sitofp %252 : vector<8x256xi32> to vector<8x256xf32>
    %254 = tpu.iota {dimensions = array<i32: 0>} : vector<8x1xi32>
    %c48_i32 = arith.constant 48 : i32
    %255 = vector.broadcast %c48_i32 : i32 to vector<8x1xi32>
    %256 = arith.addi %254, %255 : vector<8x1xi32>
    %257 = vector.extract_strided_slice %1 {offsets = [13, 0], sizes = [1, 256], strides = [1, 1]} : vector<19x256xi32> to vector<1x256xi32>
    %258 = vector.shape_cast %257 : vector<1x256xi32> to vector<256xi32>
    %259 = vector.shape_cast %258 : vector<256xi32> to vector<1x256xi32>
    %c50_i32 = arith.constant 50 : i32
    %260 = vector.broadcast %c50_i32 : i32 to vector<8x1xi32>
    %261 = arith.cmpi sge, %256, %260 : vector<8x1xi32>
    %262 = vector.extract_strided_slice %1 {offsets = [14, 0], sizes = [1, 256], strides = [1, 1]} : vector<19x256xi32> to vector<1x256xi32>
    %263 = vector.shape_cast %262 : vector<1x256xi32> to vector<256xi32>
    %264 = vector.shape_cast %263 : vector<256xi32> to vector<1x256xi32>
    %265 = vector.shape_cast %261 : vector<8x1xi1> to vector<8x1xi1>
    %266 = vector.broadcast %265 : vector<8x1xi1> to vector<8x256xi1>
    %267 = vector.shape_cast %264 : vector<1x256xi32> to vector<1x256xi32>
    %268 = vector.broadcast %267 : vector<1x256xi32> to vector<8x256xi32>
    %269 = vector.shape_cast %259 : vector<1x256xi32> to vector<1x256xi32>
    %270 = vector.broadcast %269 : vector<1x256xi32> to vector<8x256xi32>
    %271 = arith.select %266, %268, %270 : vector<8x256xi1>, vector<8x256xi32>
    %c50_i32_31 = arith.constant 50 : i32
    %c48_i32_32 = arith.constant 48 : i32
    %272 = vector.broadcast %c50_i32_31 : i32 to vector<8x1xi32>
    %273 = vector.broadcast %c48_i32_32 : i32 to vector<8x1xi32>
    %274 = arith.select %261, %272, %273 : vector<8x1xi1>, vector<8x1xi32>
    %c54_i32 = arith.constant 54 : i32
    %275 = vector.broadcast %c54_i32 : i32 to vector<8x1xi32>
    %276 = arith.cmpi sge, %256, %275 : vector<8x1xi32>
    %277 = vector.extract_strided_slice %1 {offsets = [15, 0], sizes = [1, 256], strides = [1, 1]} : vector<19x256xi32> to vector<1x256xi32>
    %278 = vector.shape_cast %277 : vector<1x256xi32> to vector<256xi32>
    %279 = vector.shape_cast %278 : vector<256xi32> to vector<1x256xi32>
    %280 = vector.shape_cast %276 : vector<8x1xi1> to vector<8x1xi1>
    %281 = vector.broadcast %280 : vector<8x1xi1> to vector<8x256xi1>
    %282 = vector.shape_cast %279 : vector<1x256xi32> to vector<1x256xi32>
    %283 = vector.broadcast %282 : vector<1x256xi32> to vector<8x256xi32>
    %284 = arith.select %281, %283, %271 : vector<8x256xi1>, vector<8x256xi32>
    %c54_i32_33 = arith.constant 54 : i32
    %285 = vector.broadcast %c54_i32_33 : i32 to vector<8x1xi32>
    %286 = arith.select %276, %285, %274 : vector<8x1xi1>, vector<8x1xi32>
    %287 = arith.subi %256, %286 : vector<8x1xi32>
    %c0_i32_34 = arith.constant 0 : i32
    %288 = vector.broadcast %c0_i32_34 : i32 to vector<8x1xi32>
    %289 = arith.cmpi eq, %287, %288 : vector<8x1xi32>
    %c-1_i32_35 = arith.constant -1 : i32
    %290 = vector.broadcast %c-1_i32_35 : i32 to vector<8x1xi32>
    %291 = arith.select %289, %290, %287 : vector<8x1xi1>, vector<8x1xi32>
    %292 = vector.broadcast %291 : vector<8x1xi32> to vector<8x256xi32>
    %293 = arith.cmpi eq, %284, %292 : vector<8x256xi32>
    %294 = arith.extui %293 : vector<8x256xi1> to vector<8x256xi32>
    %295 = arith.sitofp %294 : vector<8x256xi32> to vector<8x256xf32>
    %296 = tpu.iota {dimensions = array<i32: 0>} : vector<8x1xi32>
    %c56_i32 = arith.constant 56 : i32
    %297 = vector.broadcast %c56_i32 : i32 to vector<8x1xi32>
    %298 = arith.addi %296, %297 : vector<8x1xi32>
    %299 = vector.extract_strided_slice %1 {offsets = [15, 0], sizes = [1, 256], strides = [1, 1]} : vector<19x256xi32> to vector<1x256xi32>
    %300 = vector.shape_cast %299 : vector<1x256xi32> to vector<256xi32>
    %301 = vector.shape_cast %300 : vector<256xi32> to vector<1x256xi32>
    %c58_i32 = arith.constant 58 : i32
    %302 = vector.broadcast %c58_i32 : i32 to vector<8x1xi32>
    %303 = arith.cmpi sge, %298, %302 : vector<8x1xi32>
    %304 = vector.extract_strided_slice %1 {offsets = [16, 0], sizes = [1, 256], strides = [1, 1]} : vector<19x256xi32> to vector<1x256xi32>
    %305 = vector.shape_cast %304 : vector<1x256xi32> to vector<256xi32>
    %306 = vector.shape_cast %305 : vector<256xi32> to vector<1x256xi32>
    %307 = vector.shape_cast %303 : vector<8x1xi1> to vector<8x1xi1>
    %308 = vector.broadcast %307 : vector<8x1xi1> to vector<8x256xi1>
    %309 = vector.shape_cast %306 : vector<1x256xi32> to vector<1x256xi32>
    %310 = vector.broadcast %309 : vector<1x256xi32> to vector<8x256xi32>
    %311 = vector.shape_cast %301 : vector<1x256xi32> to vector<1x256xi32>
    %312 = vector.broadcast %311 : vector<1x256xi32> to vector<8x256xi32>
    %313 = arith.select %308, %310, %312 : vector<8x256xi1>, vector<8x256xi32>
    %c58_i32_36 = arith.constant 58 : i32
    %c54_i32_37 = arith.constant 54 : i32
    %314 = vector.broadcast %c58_i32_36 : i32 to vector<8x1xi32>
    %315 = vector.broadcast %c54_i32_37 : i32 to vector<8x1xi32>
    %316 = arith.select %303, %314, %315 : vector<8x1xi1>, vector<8x1xi32>
    %c60_i32 = arith.constant 60 : i32
    %317 = vector.broadcast %c60_i32 : i32 to vector<8x1xi32>
    %318 = arith.cmpi sge, %298, %317 : vector<8x1xi32>
    %319 = vector.extract_strided_slice %1 {offsets = [17, 0], sizes = [1, 256], strides = [1, 1]} : vector<19x256xi32> to vector<1x256xi32>
    %320 = vector.shape_cast %319 : vector<1x256xi32> to vector<256xi32>
    %321 = vector.shape_cast %320 : vector<256xi32> to vector<1x256xi32>
    %322 = vector.shape_cast %318 : vector<8x1xi1> to vector<8x1xi1>
    %323 = vector.broadcast %322 : vector<8x1xi1> to vector<8x256xi1>
    %324 = vector.shape_cast %321 : vector<1x256xi32> to vector<1x256xi32>
    %325 = vector.broadcast %324 : vector<1x256xi32> to vector<8x256xi32>
    %326 = arith.select %323, %325, %313 : vector<8x256xi1>, vector<8x256xi32>
    %c60_i32_38 = arith.constant 60 : i32
    %327 = vector.broadcast %c60_i32_38 : i32 to vector<8x1xi32>
    %328 = arith.select %318, %327, %316 : vector<8x1xi1>, vector<8x1xi32>
    %c62_i32 = arith.constant 62 : i32
    %329 = vector.broadcast %c62_i32 : i32 to vector<8x1xi32>
    %330 = arith.cmpi sge, %298, %329 : vector<8x1xi32>
    %331 = vector.extract_strided_slice %1 {offsets = [18, 0], sizes = [1, 256], strides = [1, 1]} : vector<19x256xi32> to vector<1x256xi32>
    %332 = vector.shape_cast %331 : vector<1x256xi32> to vector<256xi32>
    %333 = vector.shape_cast %332 : vector<256xi32> to vector<1x256xi32>
    %334 = vector.shape_cast %330 : vector<8x1xi1> to vector<8x1xi1>
    %335 = vector.broadcast %334 : vector<8x1xi1> to vector<8x256xi1>
    %336 = vector.shape_cast %333 : vector<1x256xi32> to vector<1x256xi32>
    %337 = vector.broadcast %336 : vector<1x256xi32> to vector<8x256xi32>
    %338 = arith.select %335, %337, %326 : vector<8x256xi1>, vector<8x256xi32>
    %c62_i32_39 = arith.constant 62 : i32
    %339 = vector.broadcast %c62_i32_39 : i32 to vector<8x1xi32>
    %340 = arith.select %330, %339, %328 : vector<8x1xi1>, vector<8x1xi32>
    %341 = arith.subi %298, %340 : vector<8x1xi32>
    %c0_i32_40 = arith.constant 0 : i32
    %342 = vector.broadcast %c0_i32_40 : i32 to vector<8x1xi32>
    %343 = arith.cmpi eq, %341, %342 : vector<8x1xi32>
    %c-1_i32_41 = arith.constant -1 : i32
    %344 = vector.broadcast %c-1_i32_41 : i32 to vector<8x1xi32>
    %345 = arith.select %343, %344, %341 : vector<8x1xi1>, vector<8x1xi32>
    %346 = vector.broadcast %345 : vector<8x1xi32> to vector<8x256xi32>
    %347 = arith.cmpi eq, %338, %346 : vector<8x256xi32>
    %348 = arith.extui %347 : vector<8x256xi1> to vector<8x256xi32>
    %349 = arith.sitofp %348 : vector<8x256xi32> to vector<8x256xf32>
    %350 = tpu.concatenate %43, %85, %127, %169, %211, %253, %295, %349 in 0 : vector<8x256xf32>, vector<8x256xf32>, vector<8x256xf32>, vector<8x256xf32>, vector<8x256xf32>, vector<8x256xf32>, vector<8x256xf32>, vector<8x256xf32> -> vector<64x256xf32>
    %c0_42 = arith.constant 0 : index
    %c0_43 = arith.constant 0 : index
    %c0_44 = arith.constant 0 : index
    %351 = vector.load %arg3[%c0_42, %c0_43, %c0_44] : memref<1x64x256xf32, #tpu.memory_space<vmem>>, vector<1x64x256xf32>
    %352 = vector.shape_cast %351 : vector<1x64x256xf32> to vector<64x256xf32>
    %353 = vector.shape_cast %350 : vector<64x256xf32> to vector<1x64x256xf32>
    tpu.vector_store %arg3[%c0_42, %c0_43, %c0_44], %353 {strides = array<i32>} : memref<1x64x256xf32, #tpu.memory_space<vmem>>, vector<1x64x256xf32>,
    return
  }
  func.func @transform_0(%arg0: i32, %arg1: i32) -> (i32, i32, i32) {
    %c0_i32 = arith.constant 0 : i32
    %c0_i32_0 = arith.constant 0 : i32
    return %arg0, %c0_i32, %arg1 : i32, i32, i32
  }
  func.func @transform_1(%arg0: i32, %arg1: i32) -> (i32, i32, i32) {
    %c0_i32 = arith.constant 0 : i32
    %c0_i32_0 = arith.constant 0 : i32
    return %arg0, %c0_i32, %arg1 : i32, i32, i32
  }
}

</mosaic_0001>

<llo_original>
// kernel: tpu_custom_call.1
$region0: #{tpu_custom_call.1}
  #allocation0 [shape = 'u32[]', space=smem, size = 0x4, offset = 0x4, fixed_abs, tag = 'smem constant byte address 0x4 - core index']
  #allocation1 [shape = 'u32[144,128]{1,0:T(1,128)}', space=vmem, size = 0x12000, scoped, tag = 'internal scratch']
  %s0 = inlined_call_operand.vmem [shape: s32[2,19,256], index: 0, kind: input, shape index: {}]
  %s1 = inlined_call_operand.hbm [shape: f32[2,64,256], index: 1, kind: output, shape index: {}]
  %s2 = sld [smem:[#allocation0]]
  $region37: #{tpu_custom_call.1} parent=0
    _
  %s4 = ssub.s32 1, %s2
  %s5 = scalar_select 0, %s4, %s2
  $region1: #{tpu_custom_call.1} parent=0
    #allocation2 [shape = 'u8[131072]{0}', space=vmem, size = 0x20000, scoped, tag = 'output window, operand 0']
    #allocation3 [shape = 's32[2]{0}', space=sflag, size = 0x8, scoped, tag = 'scoped memory for tpu_custom_call.1']
    %6 = vsyncpa [#allocation3], 0
    %s7 = scalar_lea.sflag [#allocation3], 1
    %8 = vsyncpa %s7, 0
    loop: start=0, step=1, limit=4
    $region2: #{tpu_custom_call.1} parent=1 // loop_pre_header
      _
    $region3: #{tpu_custom_call.1} parent=1 // loop_header
      %s10 = sphi 0, %s14
      %p11 = scmp.ge.s32.totalorder %s10, 4
      %s17 = sphi 0, %s29
      %s18 = sphi 0, %s25
      %s19 = sphi 0, %s17
      %s20 = sphi 0, %s18
      %s21 = sphi 0, %s19
      %s22 = sphi 0, %s20
      %s34 = sphi 0, %s36
      %s37 = sphi 0, %s34
      %s38 = sphi 0, %s37
      %s54 = sphi 0, %s38
      %s62 = sphi 0, %s64
      %s65 = sphi 0, %s62
      %s66 = sphi 0, %s65
      %s82 = sphi 0, %s66
    $region4: #{tpu_custom_call.1} parent=1 // loop_header_branch
      %13 = sbr.rel (%p11) target = $region8
    $region5: #{tpu_custom_call.1} parent=1 // loop_body
      %s15 = ssub.s32 %s10, 1
      %s16 = ssub.s32 %s10, 2
      %s23 = sadd.s32 1, %s18
      %p24 = scmp.ge.s32.totalorder %s23, 1
      %s25 = scalar_select %p24, 0, %s23
      %s26 = sadd.s32 1, %s17
      %s27 = scalar_select %p24, %s26, %s17
      %p28 = scmp.ge.s32.totalorder %s27, 2
      %s29 = scalar_select %p28, 0, %s27
      %s30 = ssub.s32 %s17, %s29
      %s31 = ssub.s32 %s18, %s25
      %s32 = sor.u32 %s30, %s31
      %p33 = scmp.eq.s32.totalorder %s32, 0
      %s35 = sadd.s32 %s34, 1
      %s36 = scalar_select %p33, %s34, %s35
      %p39 = pneg %p33
      %p40 = scmp.eq.s32.totalorder %s10, 1
      %p41 = por %p39, %p40
      %p42 = scmp.ne.s32.totalorder %s34, %s37
      %p43 = scmp.eq.s32.totalorder %s10, 0
      %p44 = por %p42, %p43
      %p45 = scmp.ne.s32.totalorder %s34, %s37
      %p46 = scmp.eq.s32.totalorder %s15, 1
      %p47 = por %p45, %p46
      %p48 = scmp.ne.s32.totalorder %s37, %s38
      %p49 = scmp.eq.s32.totalorder %s15, 0
      %p50 = por %p48, %p49
      %p51 = scmp.ne.s32.totalorder %s37, %s38
      %p52 = scmp.eq.s32.totalorder %s16, 1
      %p53 = por %p51, %p52
      %p55 = scmp.ne.s32.totalorder %s38, %s54
      %p56 = scmp.eq.s32.totalorder %s16, 0
      %p57 = por %p55, %p56
      %s58 = ssub.s32 %s17, %s29
      %s59 = ssub.s32 %s18, %s25
      %s60 = sor.u32 %s58, %s59
      %p61 = scmp.eq.s32.totalorder %s60, 0
      %s63 = sadd.s32 %s62, 1
      %s64 = scalar_select %p61, %s62, %s63
      %p67 = pneg %p61
      %p68 = scmp.eq.s32.totalorder %s10, 1
      %p69 = por %p67, %p68
      %p70 = scmp.ne.s32.totalorder %s62, %s65
      %p71 = scmp.eq.s32.totalorder %s10, 0
      %p72 = por %p70, %p71
      %p73 = scmp.ne.s32.totalorder %s62, %s65
      %p74 = scmp.eq.s32.totalorder %s15, 1
      %p75 = por %p73, %p74
      %p76 = scmp.ne.s32.totalorder %s65, %s66
      %p77 = scmp.eq.s32.totalorder %s15, 0
      %p78 = por %p76, %p77
      %p79 = scmp.ne.s32.totalorder %s65, %s66
      %p80 = scmp.eq.s32.totalorder %s16, 1
      %p81 = por %p79, %p80
      %p83 = scmp.ne.s32.totalorder %s66, %s82
      %p84 = scmp.eq.s32.totalorder %s16, 0
      %p85 = por %p83, %p84
      %p86 = scmp.le.s32.totalorder 1, %s10
      %p87 = scmp.lt.s32.totalorder %s10, 3
      %p88 = pnand %p86, %p87
      %p89 = pneg %p88
      // Predicated region
      $region9: #{tpu_custom_call.1} parent=5 // pred_check
        _
      $region10: #{tpu_custom_call.1} parent=5 // pred_check_branch
        %91 = sbr.rel (%p88) target = $region12
      $region11: #{tpu_custom_call.1} parent=5 // pred_region
        %s92 = ssub.s32 %s10, 1
      $region12: #{tpu_custom_call.1} parent=5 // pred_fallthru
        _
      %p93 = scmp.lt.s32.totalorder %s10, 2
      // Predicated region
      $region13: #{tpu_custom_call.1} parent=5 // pred_check
        %p94 = pneg %p93
      $region14: #{tpu_custom_call.1} parent=5 // pred_check_branch
        %96 = sbr.rel (%p94) target = $region16
      $region15: #{tpu_custom_call.1} parent=5 // pred_region
        // Predicated region
        $region17: #{tpu_custom_call.1} parent=15 // pred_check
          %p97 = pneg %p44
        $region18: #{tpu_custom_call.1} parent=15 // pred_check_branch
          %99 = sbr.rel (%p97) target = $region20
        $region19: #{tpu_custom_call.1} parent=15 // pred_region
          %s100 = smul.u32 2, %s18
          %p101 = scmp.lt.s32.totalorder %s17, 1
          %s102 = scalar_select %p101, %s17, 1
          %p103 = scmp.lt.s32.totalorder %s100, 1
          %s104 = scalar_select %p103, %s100, 1
          %s105 = smul.addr %s102, 6
          %s106 = sadd.s32 %s104, %s105
          %s107 = smul.addr %s106, 8
          %s108 = scalar_lea.vmem %s0, %s107
          %s109 = smul.u32 2, %s18
        $region20: #{tpu_custom_call.1} parent=15 // pred_fallthru
          _
      $region16: #{tpu_custom_call.1} parent=5 // pred_fallthru
        _
      %p110 = scmp.le.s32.totalorder 1, %s10
      %p111 = scmp.lt.s32.totalorder %s10, 3
      %p112 = pnand %p110, %p111
      %p113 = pneg %p112
      // Predicated region
      $region21: #{tpu_custom_call.1} parent=5 // pred_check
        _
      $region22: #{tpu_custom_call.1} parent=5 // pred_check_branch
        %115 = sbr.rel (%p112) target = $region24
      $region23: #{tpu_custom_call.1} parent=5 // pred_region
        %s116 = ssub.s32 %s10, 1
        %s117 = smul.u32 2, %s20
        %p118 = scmp.lt.s32.totalorder %s19, 1
        %s119 = scalar_select %p118, %s19, 1
        %p120 = scmp.lt.s32.totalorder %s117, 1
        %s121 = scalar_select %p120, %s117, 1
        %s122 = smul.addr %s119, 6
        %s123 = sadd.s32 %s121, %s122
        %s124 = smul.addr %s123, 8
        %s125 = scalar_lea.vmem %s0, %s124
        %p126 = pneg %p50
        %p127 = pneg %p47
        %p128 = pneg %p78
        %p129 = pneg %p75
        %s130 = sand.u32 %s65, 1
        %s131 = scalar_lea.sflag [#allocation3], %s130
        %s132 = sand.u32 %s65, 1
        %s133 = smul.addr %s132, 128
        %s134 = scalar_lea.vmem [#allocation2], %s133
        %s135 = smul.u32 2, %s20
        %p136 = scmp.lt.s32.totalorder %s19, 1
        %s137 = scalar_select %p136, %s19, 1
        %p138 = scmp.lt.s32.totalorder %s135, 1
        %s139 = scalar_select %p138, %s135, 1
        %s140 = smul.addr %s137, 6
        %s141 = sadd.s32 %s139, %s140
        %s142 = smul.addr %s141, 8
        %s143 = scalar_lea.vmem %s0, %s142
        %s144 = smul.u32 2, %s20
        %s145 = smul.u32 2, %s20
        %v146 = vld [vmem:[%s143] sm:$0xff]
        %v147 = vld [vmem:[%s143 + $0x8] sm:$0xff]
        %v148 = vld [vmem:[%s143 + $0x10] sm:$0xff]
        %v149 = vld [vmem:[%s143 + $0x18] sm:$0xff]
        %v150 = vld [vmem:[%s143 + $0x20] sm:$0x7]
        %v151 = vld [vmem:[%s143 + $0x28] sm:$0x7]
        %v152 = vlaneseq
        %v153 = vshrl.u32 %v152, 7
        %vm154 = vcmp.ge.s32.totalorder %v153, 3
        %v155 = vsel %vm154, 1, 0
        %vm156 = vcmp.eq.s32.totalorder %v155, 1
        %v157 = vlaneseq
        %v158 = vshrl.u32 %v157, 7
        %v159 = vsub.s32 1, %v158
        %v160 = vrot.slane %v146, %v159
        %v161 = vlaneseq
        %v162 = vshrl.u32 %v161, 7
        %v163 = vsub.s32 1, %v162
        %v164 = vrot.slane %v147, %v163
        %v165 = vlaneseq
        %v166 = vshrl.u32 %v165, 7
        %v167 = vsub.s32 0, %v166
        %v168 = vrot.slane %v146, %v167
        %v169 = vlaneseq
        %v170 = vshrl.u32 %v169, 7
        %v171 = vsub.s32 0, %v170
        %v172 = vrot.slane %v147, %v171
        %v173 = vsel %vm156, %v160, %v168
        %v174 = vsel %vm156, %v164, %v172
        %v175 = vsel %vm154, 3, 0
        %vm176 = vcmp.ge.s32.totalorder %v153, 7
        %v177 = vsel %vm176, 1, 0
        %vm178 = vcmp.eq.s32.totalorder %v177, 1
        %v179 = vlaneseq
        %v180 = vshrl.u32 %v179, 7
        %v181 = vsub.s32 2, %v180
        %v182 = vrot.slane %v146, %v181
        %v183 = vlaneseq
        %v184 = vshrl.u32 %v183, 7
        %v185 = vsub.s32 2, %v184
        %v186 = vrot.slane %v147, %v185
        %v187 = vsel %vm178, %v182, %v173
        %v188 = vsel %vm178, %v186, %v174
        %v189 = vsel %vm176, 7, %v175
        %v190 = vsub.s32 %v153, %v189
        %vm191 = vcmp.eq.s32.totalorder %v190, 0
        %v192 = vsel %vm191, 4294967295, %v190
        %vm193 = vcmp.eq.s32.totalorder %v187, %v192
        %vm194 = vcmp.eq.s32.totalorder %v188, %v192
        %v195 = vsel %vm193, 1, 0
        %v196 = vsel %vm194, 1, 0
        %v197 = vcvt.s32.f32 %v195
        %v198 = vcvt.s32.f32 %v196
        %v199 = vadd.s32 %v153, 8
        %vm200 = vcmp.ge.s32.totalorder %v199, 12
        %v201 = vsel %vm200, 1, 0
        %vm202 = vcmp.eq.s32.totalorder %v201, 1
        %v203 = vlaneseq
        %v204 = vshrl.u32 %v203, 7
        %v205 = vsub.s32 3, %v204
        %v206 = vrot.slane %v146, %v205
        %v207 = vlaneseq
        %v208 = vshrl.u32 %v207, 7
        %v209 = vsub.s32 3, %v208
        %v210 = vrot.slane %v147, %v209
        %v211 = vsel %vm202, %v206, %v182
        %v212 = vsel %vm202, %v210, %v186
        %v213 = vsel %vm200, 12, 7
        %vm214 = vcmp.ge.s32.totalorder %v199, 15
        %v215 = vsel %vm214, 1, 0
        %vm216 = vcmp.eq.s32.totalorder %v215, 1
        %v217 = vlaneseq
        %v218 = vshrl.u32 %v217, 7
        %v219 = vsub.s32 4, %v218
        %v220 = vrot.slane %v146, %v219
        %v221 = vlaneseq
        %v222 = vshrl.u32 %v221, 7
        %v223 = vsub.s32 4, %v222
        %v224 = vrot.slane %v147, %v223
        %v225 = vsel %vm216, %v220, %v211
        %v226 = vsel %vm216, %v224, %v212
        %v227 = vsel %vm214, 15, %v213
        %v228 = vsub.s32 %v199, %v227
        %vm229 = vcmp.eq.s32.totalorder %v228, 0
        %v230 = vsel %vm229, 4294967295, %v228
        %vm231 = vcmp.eq.s32.totalorder %v225, %v230
        %vm232 = vcmp.eq.s32.totalorder %v226, %v230
        %v233 = vsel %vm231, 1, 0
        %v234 = vsel %vm232, 1, 0
        %v235 = vcvt.s32.f32 %v233
        %v236 = vcvt.s32.f32 %v234
        %v237 = vadd.s32 %v153, 16
        %vm238 = vcmp.ge.s32.totalorder %v237, 19
        %v239 = vsel %vm238, 1, 0
        %vm240 = vcmp.eq.s32.totalorder %v239, 1
        %v241 = vlaneseq
        %v242 = vshrl.u32 %v241, 7
        %v243 = vsub.s32 5, %v242
        %v244 = vrot.slane %v146, %v243
        %v245 = vlaneseq
        %v246 = vshrl.u32 %v245, 7
        %v247 = vsub.s32 5, %v246
        %v248 = vrot.slane %v147, %v247
        %v249 = vsel %vm240, %v244, %v220
        %v250 = vsel %vm240, %v248, %v224
        %v251 = vsel %vm238, 19, 15
        %vm252 = vcmp.ge.s32.totalorder %v237, 22
        %v253 = vsel %vm252, 1, 0
        %vm254 = vcmp.eq.s32.totalorder %v253, 1
        %v255 = vlaneseq
        %v256 = vshrl.u32 %v255, 7
        %v257 = vsub.s32 6, %v256
        %v258 = vrot.slane %v146, %v257
        %v259 = vlaneseq
        %v260 = vshrl.u32 %v259, 7
        %v261 = vsub.s32 6, %v260
        %v262 = vrot.slane %v147, %v261
        %v263 = vsel %vm254, %v258, %v249
        %v264 = vsel %vm254, %v262, %v250
        %v265 = vsel %vm252, 22, %v251
        %v266 = vsub.s32 %v237, %v265
        %vm267 = vcmp.eq.s32.totalorder %v266, 0
        %v268 = vsel %vm267, 4294967295, %v266
        %vm269 = vcmp.eq.s32.totalorder %v263, %v268
        %vm270 = vcmp.eq.s32.totalorder %v264, %v268
        %v271 = vsel %vm269, 1, 0
        %v272 = vsel %vm270, 1, 0
        %v273 = vcvt.s32.f32 %v271
        %v274 = vcvt.s32.f32 %v272
        %v275 = vadd.s32 %v153, 24
        %vm276 = vcmp.ge.s32.totalorder %v275, 27
        %v277 = vsel %vm276, 1, 0
        %vm278 = vcmp.eq.s32.totalorder %v277, 1
        %v279 = vlaneseq
        %v280 = vshrl.u32 %v279, 7
        %v281 = vsub.s32 7, %v280
        %v282 = vrot.slane %v146, %v281
        %v283 = vlaneseq
        %v284 = vshrl.u32 %v283, 7
        %v285 = vsub.s32 7, %v284
        %v286 = vrot.slane %v147, %v285
        %v287 = vsel %vm278, %v282, %v258
        %v288 = vsel %vm278, %v286, %v262
        %v289 = vsel %vm276, 27, 22
        %vm290 = vcmp.ge.s32.totalorder %v275, 31
        %v291 = vsel %vm290, 1, 0
        %vm292 = vcmp.eq.s32.totalorder %v291, 1
        %v293 = vlaneseq
        %v294 = vshrl.u32 %v293, 7
        %v295 = vsub.s32 0, %v294
        %v296 = vrot.slane %v148, %v295
        %v297 = vlaneseq
        %v298 = vshrl.u32 %v297, 7
        %v299 = vsub.s32 0, %v298
        %v300 = vrot.slane %v149, %v299
        %v301 = vsel %vm292, %v296, %v287
        %v302 = vsel %vm292, %v300, %v288
        %v303 = vsel %vm290, 31, %v289
        %v304 = vsub.s32 %v275, %v303
        %vm305 = vcmp.eq.s32.totalorder %v304, 0
        %v306 = vsel %vm305, 4294967295, %v304
        %vm307 = vcmp.eq.s32.totalorder %v301, %v306
        %vm308 = vcmp.eq.s32.totalorder %v302, %v306
        %v309 = vsel %vm307, 1, 0
        %v310 = vsel %vm308, 1, 0
        %v311 = vcvt.s32.f32 %v309
        %v312 = vcvt.s32.f32 %v310
        %v313 = vadd.s32 %v153, 32
        %vm314 = vcmp.ge.s32.totalorder %v313, 35
        %v315 = vsel %vm314, 1, 0
        %vm316 = vcmp.eq.s32.totalorder %v315, 1
        %v317 = vlaneseq
        %v318 = vshrl.u32 %v317, 7
        %v319 = vsub.s32 1, %v318
        %v320 = vrot.slane %v148, %v319
        %v321 = vlaneseq
        %v322 = vshrl.u32 %v321, 7
        %v323 = vsub.s32 1, %v322
        %v324 = vrot.slane %v149, %v323
        %v325 = vsel %vm316, %v320, %v296
        %v326 = vsel %vm316, %v324, %v300
        %v327 = vsel %vm314, 35, 31
        %vm328 = vcmp.ge.s32.totalorder %v313, 39
        %v329 = vsel %vm328, 1, 0
        %vm330 = vcmp.eq.s32.totalorder %v329, 1
        %v331 = vlaneseq
        %v332 = vshrl.u32 %v331, 7
        %v333 = vsub.s32 2, %v332
        %v334 = vrot.slane %v148, %v333
        %v335 = vlaneseq
        %v336 = vshrl.u32 %v335, 7
        %v337 = vsub.s32 2, %v336
        %v338 = vrot.slane %v149, %v337
        %v339 = vsel %vm330, %v334, %v325
        %v340 = vsel %vm330, %v338, %v326
        %v341 = vsel %vm328, 39, %v327
        %v342 = vsub.s32 %v313, %v341
        %vm343 = vcmp.eq.s32.totalorder %v342, 0
        %v344 = vsel %vm343, 4294967295, %v342
        %vm345 = vcmp.eq.s32.totalorder %v339, %v344
        %vm346 = vcmp.eq.s32.totalorder %v340, %v344
        %v347 = vsel %vm345, 1, 0
        %v348 = vsel %vm346, 1, 0
        %v349 = vcvt.s32.f32 %v347
        %v350 = vcvt.s32.f32 %v348
        %v351 = vadd.s32 %v153, 40
        %vm352 = vcmp.ge.s32.totalorder %v351, 42
        %v353 = vsel %vm352, 1, 0
        %vm354 = vcmp.eq.s32.totalorder %v353, 1
        %v355 = vlaneseq
        %v356 = vshrl.u32 %v355, 7
        %v357 = vsub.s32 3, %v356
        %v358 = vrot.slane %v148, %v357
        %v359 = vlaneseq
        %v360 = vshrl.u32 %v359, 7
        %v361 = vsub.s32 3, %v360
        %v362 = vrot.slane %v149, %v361
        %v363 = vsel %vm354, %v358, %v334
        %v364 = vsel %vm354, %v362, %v338
        %v365 = vsel %vm352, 42, 39
        %vm366 = vcmp.ge.s32.totalorder %v351, 45
        %v367 = vsel %vm366, 1, 0
        %vm368 = vcmp.eq.s32.totalorder %v367, 1
        %v369 = vlaneseq
        %v370 = vshrl.u32 %v369, 7
        %v371 = vsub.s32 4, %v370
        %v372 = vrot.slane %v148, %v371
        %v373 = vlaneseq
        %v374 = vshrl.u32 %v373, 7
        %v375 = vsub.s32 4, %v374
        %v376 = vrot.slane %v149, %v375
        %v377 = vsel %vm368, %v372, %v363
        %v378 = vsel %vm368, %v376, %v364
        %v379 = vsel %vm366, 45, %v365
        %v380 = vsub.s32 %v351, %v379
        %vm381 = vcmp.eq.s32.totalorder %v380, 0
        %v382 = vsel %vm381, 4294967295, %v380
        %vm383 = vcmp.eq.s32.totalorder %v377, %v382
        %vm384 = vcmp.eq.s32.totalorder %v378, %v382
        %v385 = vsel %vm383, 1, 0
        %v386 = vsel %vm384, 1, 0
        %v387 = vcvt.s32.f32 %v385
        %v388 = vcvt.s32.f32 %v386
        %v389 = vadd.s32 %v153, 48
        %vm390 = vcmp.ge.s32.totalorder %v389, 50
        %v391 = vsel %vm390, 1, 0
        %vm392 = vcmp.eq.s32.totalorder %v391, 1
        %v393 = vlaneseq
        %v394 = vshrl.u32 %v393, 7
        %v395 = vsub.s32 6, %v394
        %v396 = vrot.slane %v148, %v395
        %v397 = vlaneseq
        %v398 = vshrl.u32 %v397, 7
        %v399 = vsub.s32 6, %v398
        %v400 = vrot.slane %v149, %v399
        %v401 = vlaneseq
        %v402 = vshrl.u32 %v401, 7
        %v403 = vsub.s32 5, %v402
        %v404 = vrot.slane %v148, %v403
        %v405 = vlaneseq
        %v406 = vshrl.u32 %v405, 7
        %v407 = vsub.s32 5, %v406
        %v408 = vrot.slane %v149, %v407
        %v409 = vsel %vm392, %v396, %v404
        %v410 = vsel %vm392, %v400, %v408
        %v411 = vsel %vm390, 50, 48
        %vm412 = vcmp.ge.s32.totalorder %v389, 54
        %v413 = vsel %vm412, 1, 0
        %vm414 = vcmp.eq.s32.totalorder %v413, 1
        %v415 = vlaneseq
        %v416 = vshrl.u32 %v415, 7
        %v417 = vsub.s32 7, %v416
        %v418 = vrot.slane %v148, %v417
        %v419 = vlaneseq
        %v420 = vshrl.u32 %v419, 7
        %v421 = vsub.s32 7, %v420
        %v422 = vrot.slane %v149, %v421
        %v423 = vsel %vm414, %v418, %v409
        %v424 = vsel %vm414, %v422, %v410
        %v425 = vsel %vm412, 54, %v411
        %v426 = vsub.s32 %v389, %v425
        %vm427 = vcmp.eq.s32.totalorder %v426, 0
        %v428 = vsel %vm427, 4294967295, %v426
        %vm429 = vcmp.eq.s32.totalorder %v423, %v428
        %vm430 = vcmp.eq.s32.totalorder %v424, %v428
        %v431 = vsel %vm429, 1, 0
        %v432 = vsel %vm430, 1, 0
        %v433 = vcvt.s32.f32 %v431
        %v434 = vcvt.s32.f32 %v432
        %v435 = vadd.s32 %v153, 56
        %vm436 = vcmp.ge.s32.totalorder %v435, 58
        %v437 = vsel %vm436, 1, 0
        %vm438 = vcmp.eq.s32.totalorder %v437, 1
        %v439 = vlaneseq
        %v440 = vshrl.u32 %v439, 7
        %v441 = vsub.s32 0, %v440
        %v442 = vrot.slane %v150, %v441
        %v443 = vlaneseq
        %v444 = vshrl.u32 %v443, 7
        %v445 = vsub.s32 0, %v444
        %v446 = vrot.slane %v151, %v445
        %v447 = vsel %vm438, %v442, %v418
        %v448 = vsel %vm438, %v446, %v422
        %v449 = vsel %vm436, 58, 54
        %vm450 = vcmp.ge.s32.totalorder %v435, 60
        %v451 = vsel %vm450, 1, 0
        %vm452 = vcmp.eq.s32.totalorder %v451, 1
        %v453 = vlaneseq
        %v454 = vshrl.u32 %v453, 7
        %v455 = vsub.s32 1, %v454
        %v456 = vrot.slane %v150, %v455
        %v457 = vlaneseq
        %v458 = vshrl.u32 %v457, 7
        %v459 = vsub.s32 1, %v458
        %v460 = vrot.slane %v151, %v459
        %v461 = vsel %vm452, %v456, %v447
        %v462 = vsel %vm452, %v460, %v448
        %v463 = vsel %vm450, 60, %v449
        %vm464 = vcmp.ge.s32.totalorder %v435, 62
        %v465 = vsel %vm464, 1, 0
        %vm466 = vcmp.eq.s32.totalorder %v465, 1
        %v467 = vlaneseq
        %v468 = vshrl.u32 %v467, 7
        %v469 = vsub.s32 2, %v468
        %v470 = vrot.slane %v150, %v469
        %v471 = vlaneseq
        %v472 = vshrl.u32 %v471, 7
        %v473 = vsub.s32 2, %v472
        %v474 = vrot.slane %v151, %v473
        %v475 = vsel %vm466, %v470, %v461
        %v476 = vsel %vm466, %v474, %v462
        %v477 = vsel %vm464, 62, %v463
        %v478 = vsub.s32 %v435, %v477
        %vm479 = vcmp.eq.s32.totalorder %v478, 0
        %v480 = vsel %vm479, 4294967295, %v478
        %vm481 = vcmp.eq.s32.totalorder %v475, %v480
        %vm482 = vcmp.eq.s32.totalorder %v476, %v480
        %v483 = vsel %vm481, 1, 0
        %v484 = vsel %vm482, 1, 0
        %v485 = vcvt.s32.f32 %v483
        %v486 = vcvt.s32.f32 %v484
        %487 = vst [vmem:[%s134] sm:$0xff] %v197
        %488 = vst [vmem:[%s134 + $0x8] sm:$0xff] %v198
        %489 = vst [vmem:[%s134 + $0x10] sm:$0xff] %v235
        %490 = vst [vmem:[%s134 + $0x18] sm:$0xff] %v236
        %491 = vst [vmem:[%s134 + $0x20] sm:$0xff] %v273
        %492 = vst [vmem:[%s134 + $0x28] sm:$0xff] %v274
        %493 = vst [vmem:[%s134 + $0x30] sm:$0xff] %v311
        %494 = vst [vmem:[%s134 + $0x38] sm:$0xff] %v312
        %495 = vst [vmem:[%s134 + $0x40] sm:$0xff] %v349
        %496 = vst [vmem:[%s134 + $0x48] sm:$0xff] %v350
        %497 = vst [vmem:[%s134 + $0x50] sm:$0xff] %v387
        %498 = vst [vmem:[%s134 + $0x58] sm:$0xff] %v388
        %499 = vst [vmem:[%s134 + $0x60] sm:$0xff] %v433
        %500 = vst [vmem:[%s134 + $0x68] sm:$0xff] %v434
        %501 = vst [vmem:[%s134 + $0x70] sm:$0xff] %v485
        %502 = vst [vmem:[%s134 + $0x78] sm:$0xff] %v486
        %s503 = sand.u32 %s65, 1
        %s504 = scalar_lea.sflag [#allocation3], %s503
        %s505 = sand.u32 %s65, 1
        %s506 = smul.addr %s505, 128
        %s507 = scalar_lea.vmem [#allocation2], %s506
        // Predicated region
        $region25: #{tpu_custom_call.1} parent=23 // pred_check
          %p508 = pneg %p75
        $region26: #{tpu_custom_call.1} parent=23 // pred_check_branch
          %510 = sbr.rel (%p508) target = $region28
        $region27: #{tpu_custom_call.1} parent=23 // pred_region
          %s511 = smul.u32 2, %s20
          %s513 = ssub.s32 2048, 2048
          %514 = vsyncadd %s504, %s513
          %s515 = smul.addr %s19, 16
          %s516 = sadd.s32 %s511, %s515
          %s517 = smul.addr %s516, 128
          %s518 = scalar_lea.hbm %s1, %s517
          %s519 = sshll.u32 %s507, 4
          %s520 = int_to_ptr.vmem [resolvable:$true] %s519
          %525 = dma.vmem_to_hbm [thread:$0]  %s520, 2048, %s518, %s504, 256, 256, 16
        $region28: #{tpu_custom_call.1} parent=23 // pred_fallthru
          _
      $region24: #{tpu_custom_call.1} parent=5 // pred_fallthru
        _
      %p526 = scmp.le.s32.totalorder 2, %s10
      // Predicated region
      $region29: #{tpu_custom_call.1} parent=5 // pred_check
        %p527 = pneg %p526
      $region30: #{tpu_custom_call.1} parent=5 // pred_check_branch
        %529 = sbr.rel (%p527) target = $region32
      $region31: #{tpu_custom_call.1} parent=5 // pred_region
        %s530 = ssub.s32 %s10, 2
        // Predicated region
        $region33: #{tpu_custom_call.1} parent=31 // pred_check
          %p531 = pneg %p81
        $region34: #{tpu_custom_call.1} parent=31 // pred_check_branch
          %533 = sbr.rel (%p531) target = $region36
        $region35: #{tpu_custom_call.1} parent=31 // pred_region
          %s534 = sand.u32 %s66, 1
          %s535 = scalar_lea.sflag [#allocation3], %s534
          %s536 = sand.u32 %s66, 1
          %s537 = smul.addr %s536, 128
          %s538 = scalar_lea.vmem [#allocation2], %s537
          %539 = dma.done %s535, 2048
        $region36: #{tpu_custom_call.1} parent=31 // pred_fallthru
          _
      $region32: #{tpu_custom_call.1} parent=5 // pred_fallthru
        _
    $region6: #{tpu_custom_call.1} parent=1 // loop_footer
      %s14 = sadd.s32 1, %s10
    $region7: #{tpu_custom_call.1} parent=1 // loop_footer_branch
      %9 = sbr.rel target = $region3
    $region8: #{tpu_custom_call.1} parent=1 // loop_exit
      _
    %540 = vsyncpa [#allocation3], 1
    %s541 = scalar_lea.sflag [#allocation3], 1
    %542 = vsyncpa %s541, 1

</llo_original>
